<compile_context>
chip_gen: v7x
topology: tpu7x:2x2x1
jax: 0.10.0
libtpu: 0.0.40
codegen_flags: <defaults>
</compile_context>

<pallas_src>
import functools

import jax
import jax.numpy as jnp
from jax.experimental import pallas as pl
from jax.experimental.pallas import tpu as pltpu

EPS = 1e-12


def _normal_loss_kernel(pred_ref, gt_ref, out_ref, acc_ref, *, hw, n_valid,
                        needs_mask):
    # pred_ref / gt_ref : (C, TM) tile of the (N, C, HW) inputs (N squeezed)
    # out_ref           : (1, 1) scalar loss
    # acc_ref           : (1, TM) f32 per-lane running sum of (1 - cos)
    n = pl.program_id(0)
    i = pl.program_id(1)

    @pl.when(jnp.logical_and(n == 0, i == 0))
    def _():
        acc_ref[...] = jnp.zeros_like(acc_ref)

    a = pred_ref[...].astype(jnp.float32)          # (C, TM)
    b = gt_ref[...].astype(jnp.float32)

    dot = jnp.sum(a * b, axis=0, keepdims=True)    # (1, TM)
    na2 = jnp.sum(a * a, axis=0, keepdims=True)    # (1, TM)
    nb2 = jnp.sum(b * b, axis=0, keepdims=True)    # (1, TM)
    # torch: w12 / sqrt(clamp_min(w1*w2, eps*eps))  ==  dot * rsqrt(max(., eps^2))
    cos = dot * jax.lax.rsqrt(jnp.maximum(na2 * nb2, jnp.float32(EPS * EPS)))
    contrib = 1.0 - cos

    if needs_mask:
        tm = acc_ref.shape[1]
        lane = jax.lax.broadcasted_iota(jnp.int32, (1, tm), 1)
        valid = (i * tm + lane) < hw               # mask ragged last pixel tile
        contrib = jnp.where(valid, contrib, 0.0)

    acc_ref[...] += contrib

    @pl.when(jnp.logical_and(n == pl.num_programs(0) - 1,
                             i == pl.num_programs(1) - 1))
    def _():
        total = jnp.sum(acc_ref[...], keepdims=True)          # (1, 1)
        out_ref[...] = total / jnp.float32(n_valid)


def _pick_tile_m(C, HW, dtype, vmem_budget_bytes):
    """Largest lane tile (multiple of 128) fitting a conservative VMEM budget."""
    c_pad = -(-C // 8) * 8                       # sublane padding of the C axis
    in_bytes = jnp.dtype(dtype).itemsize
    # 2 inputs x 2 pipeline buffers x padded-C x itemsize  +  f32 acc row
    # (acc row of shape (1, tile_m) pads to 8 sublanes -> 32 B per lane).
    per_lane = 2 * 2 * c_pad * in_bytes + 32
    tile_m = max(128, (vmem_budget_bytes // per_lane) // 128 * 128)
    # never exceed the (128-rounded) pixel count
    tile_m = min(tile_m, -(-HW // 128) * 128)
    return tile_m


def normal_loss(normal_pred, normal_gt, *, tile_m=None,
                vmem_budget_bytes=8 << 20):
    """normal_pred, normal_gt: NCHW arrays. Returns scalar loss (f32)."""
    assert normal_pred.shape == normal_gt.shape
    N, C, H, W = normal_pred.shape
    HW = H * W

    # Free view: NCHW -> (N, C, HW).  No transpose, no padding copies in HBM.
    pred = normal_pred.reshape(N, C, HW)
    gt = normal_gt.reshape(N, C, HW)

    if tile_m is None:
        tile_m = _pick_tile_m(C, HW, normal_pred.dtype, vmem_budget_bytes)
    else:
        tile_m = min(max(128, (tile_m // 128) * 128), -(-HW // 128) * 128)

    num_tiles = pl.cdiv(HW, tile_m)
    grid = (N, num_tiles)

    kernel = functools.partial(
        _normal_loss_kernel,
        hw=HW,
        n_valid=N * HW,
        needs_mask=(HW % tile_m != 0),
    )

    out = pl.pallas_call(
        kernel,
        out_shape=jax.ShapeDtypeStruct((1, 1), jnp.float32),
        grid_spec=pltpu.PrefetchScalarGridSpec(
            num_scalar_prefetch=0,
            grid=grid,
            in_specs=[
                pl.BlockSpec((None, C, tile_m), lambda n, i: (n, 0, i)),
                pl.BlockSpec((None, C, tile_m), lambda n, i: (n, 0, i)),
            ],
            out_specs=pl.BlockSpec((1, 1), lambda n, i: (0, 0)),
            scratch_shapes=[pltpu.VMEM((1, tile_m), jnp.float32)],
        ),
        compiler_params=pltpu.CompilerParams(
            # Output is a single accumulated scalar -> both axes are reductions
            # (the VMEM accumulator must persist across every grid step).
            dimension_semantics=("arbitrary", "arbitrary"),
        ),
    )(pred, gt)

    return out[0, 0]


def normal_loss_ref(normal_pred, normal_gt):
    """Pure-JAX reference matching torch.nn.CosineSimilarity(dim=1, eps=1e-12)."""
    a = normal_pred.astype(jnp.float32)
    b = normal_gt.astype(jnp.float32)
    dot = jnp.sum(a * b, axis=1)
    na2 = jnp.sum(a * a, axis=1)
    nb2 = jnp.sum(b * b, axis=1)
    cos = dot / jnp.sqrt(jnp.maximum(na2 * nb2, EPS * EPS))
    return jnp.mean(1.0 - cos)


if __name__ == "__main__":
    key = jax.random.PRNGKey(0)
    k1, k2 = jax.random.split(key)

    N, C, H, W = 2, 4, 16, 16  # small NCHW shapes (e.g. 4-channel "normal" maps)
    normal_pred = jax.random.normal(k1, (N, C, H, W), dtype=jnp.float32)
    normal_gt = jax.random.normal(k2, (N, C, H, W), dtype=jnp.float32)

    loss = jax.block_until_ready(normal_loss(normal_pred, normal_gt))
    loss_ref = jax.block_until_ready(normal_loss_ref(normal_pred, normal_gt))

    assert jnp.allclose(loss, loss_ref, atol=1e-5, rtol=1e-5), (loss, loss_ref)
    print("KERNEL_OK")
</pallas_src>

<mosaic_0001>
module attributes {stable_mosaic.version = 11 : i64} {
  func.func @_normal_loss_kernel(%arg0: i32, %arg1: i32, %arg2: memref<1x4x256xf32, #tpu.memory_space<vmem>>, %arg3: memref<1x4x256xf32, #tpu.memory_space<vmem>>, %arg4: memref<1x1xf32, #tpu.memory_space<vmem>>, %arg5: memref<1x256xf32, #tpu.memory_space<vmem>>) attributes {dimension_semantics = [#tpu.dimension_semantics<arbitrary>, #tpu.dimension_semantics<arbitrary>], iteration_bounds = array<i64: 2, 1>, scalar_prefetch = 0 : i64, scratch_operands = 1 : i64, tpu.core_type = #tpu.core_type<tc>, window_params = [{transform_indices = @transform_0, window_bounds = array<i64: 1, 4, 256>}, {transform_indices = @transform_1, window_bounds = array<i64: 1, 4, 256>}, {pipeline_mode = #tpu.pipeline_mode<synchronous>, transform_indices = @transform_2, window_bounds = array<i64: 1, 1>}]} {
    %c0_i32 = arith.constant 0 : i32
    %0 = arith.cmpi eq, %arg0, %c0_i32 : i32
    %c0_i32_0 = arith.constant 0 : i32
    %1 = arith.cmpi eq, %arg1, %c0_i32_0 : i32
    %2 = arith.andi %0, %1 : i1
    %3 = arith.extui %2 : i1 to i32
    %c0_i32_1 = arith.constant 0 : i32
    %4 = arith.cmpi ne, %3, %c0_i32_1 : i32
    scf.if %4 {
      %cst_17 = arith.constant 0.000000e+00 : f32
      %33 = vector.broadcast %cst_17 : f32 to vector<1x256xf32>
      %c0_18 = arith.constant 0 : index
      %c0_19 = arith.constant 0 : index
      %34 = vector.load %arg5[%c0_18, %c0_19] : memref<1x256xf32, #tpu.memory_space<vmem>>, vector<1x256xf32>
      tpu.vector_store %arg5[%c0_18, %c0_19], %33 {strides = array<i32>} : memref<1x256xf32, #tpu.memory_space<vmem>>, vector<1x256xf32>,
    } else {
    }
    %c0 = arith.constant 0 : index
    %c0_2 = arith.constant 0 : index
    %c0_3 = arith.constant 0 : index
    %5 = vector.load %arg2[%c0, %c0_2, %c0_3] : memref<1x4x256xf32, #tpu.memory_space<vmem>>, vector<1x4x256xf32>
    %6 = vector.shape_cast %5 : vector<1x4x256xf32> to vector<4x256xf32>
    %c0_4 = arith.constant 0 : index
    %c0_5 = arith.constant 0 : index
    %c0_6 = arith.constant 0 : index
    %7 = vector.load %arg3[%c0_4, %c0_5, %c0_6] : memref<1x4x256xf32, #tpu.memory_space<vmem>>, vector<1x4x256xf32>
    %8 = vector.shape_cast %7 : vector<1x4x256xf32> to vector<4x256xf32>
    %9 = arith.mulf %6, %8 : vector<4x256xf32>
    %cst = arith.constant dense<0.000000e+00> : vector<256xf32>
    %10 = vector.multi_reduction <add>, %9, %cst [0] : vector<4x256xf32> to vector<256xf32>
    %11 = vector.shape_cast %10 : vector<256xf32> to vector<1x256xf32>
    %12 = arith.mulf %6, %6 : vector<4x256xf32>
    %cst_7 = arith.constant dense<0.000000e+00> : vector<256xf32>
    %13 = vector.multi_reduction <add>, %12, %cst_7 [0] : vector<4x256xf32> to vector<256xf32>
    %14 = vector.shape_cast %13 : vector<256xf32> to vector<1x256xf32>
    %15 = arith.mulf %8, %8 : vector<4x256xf32>
    %cst_8 = arith.constant dense<0.000000e+00> : vector<256xf32>
    %16 = vector.multi_reduction <add>, %15, %cst_8 [0] : vector<4x256xf32> to vector<256xf32>
    %17 = vector.shape_cast %16 : vector<256xf32> to vector<1x256xf32>
    %18 = arith.mulf %14, %17 : vector<1x256xf32>
    %cst_9 = arith.constant 1.000000e-24 : f32
    %19 = vector.broadcast %cst_9 : f32 to vector<1x256xf32>
    %20 = arith.maximumf %18, %19 : vector<1x256xf32>
    %21 = math.rsqrt %20 : vector<1x256xf32>
    %22 = arith.mulf %11, %21 : vector<1x256xf32>
    %cst_10 = arith.constant 1.000000e+00 : f32
    %23 = vector.broadcast %cst_10 : f32 to vector<1x256xf32>
    %24 = arith.subf %23, %22 : vector<1x256xf32>
    %c0_11 = arith.constant 0 : index
    %c0_12 = arith.constant 0 : index
    %25 = vector.load %arg5[%c0_11, %c0_12] : memref<1x256xf32, #tpu.memory_space<vmem>>, vector<1x256xf32>
    %26 = arith.addf %25, %24 : vector<1x256xf32>
    %c0_13 = arith.constant 0 : index
    %c0_14 = arith.constant 0 : index
    %27 = vector.load %arg5[%c0_13, %c0_14] : memref<1x256xf32, #tpu.memory_space<vmem>>, vector<1x256xf32>
    tpu.vector_store %arg5[%c0_13, %c0_14], %26 {strides = array<i32>} : memref<1x256xf32, #tpu.memory_space<vmem>>, vector<1x256xf32>,
    %c1_i32 = arith.constant 1 : i32
    %28 = arith.cmpi eq, %arg0, %c1_i32 : i32
    %c0_i32_15 = arith.constant 0 : i32
    %29 = arith.cmpi eq, %arg1, %c0_i32_15 : i32
    %30 = arith.andi %28, %29 : i1
    %31 = arith.extui %30 : i1 to i32
    %c0_i32_16 = arith.constant 0 : i32
    %32 = arith.cmpi ne, %31, %c0_i32_16 : i32
    scf.if %32 {
      %c0_17 = arith.constant 0 : index
      %c0_18 = arith.constant 0 : index
      %33 = vector.load %arg5[%c0_17, %c0_18] : memref<1x256xf32, #tpu.memory_space<vmem>>, vector<1x256xf32>
      %34 = vector.shape_cast %33 : vector<1x256xf32> to vector<1x1x256xf32>
      %cst_19 = arith.constant dense<0.000000e+00> : vector<1xf32>
      %35 = vector.multi_reduction <add>, %34, %cst_19 [1, 2] : vector<1x1x256xf32> to vector<1xf32>
      %36 = vector.shape_cast %35 : vector<1xf32> to vector<1x1x1xf32>
      %37 = vector.extract %36[0, 0, 0] : f32 from vector<1x1x1xf32>
      %38 = vector.broadcast %37 : f32 to vector<1x1xf32>
      %cst_20 = arith.constant 5.120000e+02 : f32
      %39 = vector.broadcast %cst_20 : f32 to vector<1x1xf32>
      %40 = arith.divf %38, %39 : vector<1x1xf32>
      %c0_21 = arith.constant 0 : index
      %c0_22 = arith.constant 0 : index
      %41 = vector.load %arg4[%c0_21, %c0_22] : memref<1x1xf32, #tpu.memory_space<vmem>>, vector<1x1xf32>
      tpu.vector_store %arg4[%c0_21, %c0_22], %40 {strides = array<i32>} : memref<1x1xf32, #tpu.memory_space<vmem>>, vector<1x1xf32>,
    } else {
    }
    return
  }
  func.func @transform_0(%arg0: i32, %arg1: i32) -> (i32, i32, i32) {
    %c0_i32 = arith.constant 0 : i32
    %c0_i32_0 = arith.constant 0 : i32
    return %arg0, %c0_i32, %arg1 : i32, i32, i32
  }
  func.func @transform_1(%arg0: i32, %arg1: i32) -> (i32, i32, i32) {
    %c0_i32 = arith.constant 0 : i32
    %c0_i32_0 = arith.constant 0 : i32
    return %arg0, %c0_i32, %arg1 : i32, i32, i32
  }
  func.func @transform_2(%arg0: i32, %arg1: i32) -> (i32, i32) {
    %c0_i32 = arith.constant 0 : i32
    %c0_i32_0 = arith.constant 0 : i32
    %c0_i32_1 = arith.constant 0 : i32
    return %c0_i32, %c0_i32_0 : i32, i32
  }
}

</mosaic_0001>

<llo_original>
// kernel: tpu_custom_call.1
$region0: #{tpu_custom_call.1}
  #allocation0 [shape = 'u32[]', space=smem, size = 0x4, offset = 0x4, fixed_abs, tag = 'smem constant byte address 0x4 - core index']
  #allocation1 [shape = 'u32[144,128]{1,0:T(1,128)}', space=vmem, size = 0x12000, scoped, tag = 'internal scratch']
  #allocation2 [shape = 'f32[1,256]{1,0:T(1,128)}', space=vmem, size = 0x400, scoped, tag = 'scratch operand']
  %s0 = inlined_call_operand.hbm [shape: f32[2,4,256], index: 0, kind: input, shape index: {}]
  %s1 = inlined_call_operand.hbm [shape: f32[2,4,256], index: 1, kind: input, shape index: {}]
  %s2 = inlined_call_operand.hbm [shape: f32[1,1], index: 2, kind: output, shape index: {}]
  %s3 = sld [smem:[#allocation0]]
  $region57: #{tpu_custom_call.1} parent=0
    _
  %s5 = ssub.s32 1, %s3
  %s6 = scalar_select 0, %s5, %s3
  $region1: #{tpu_custom_call.1} parent=0
    #allocation3 [shape = 'u8[8192]{0}', space=vmem, size = 0x2000, scoped, tag = 'input window, operand 0']
    #allocation4 [shape = 's32[2]{0}', space=sflag, size = 0x8, scoped, tag = 'scoped memory for tpu_custom_call.1']
    #allocation5 [shape = 's32[2]{0}', space=sflag, size = 0x8, scoped, tag = 'scoped memory for tpu_custom_call.1']
    #allocation6 [shape = 'u8[8192]{0}', space=vmem, size = 0x2000, scoped, tag = 'input window, operand 1']
    #allocation7 [shape = 's32[2]{0}', space=sflag, size = 0x8, scoped, tag = 'scoped memory for tpu_custom_call.1']
    #allocation8 [shape = 'u8[512]{0}', space=vmem, size = 0x400, scoped, tag = 'output window, operand 0, single buffered']
    %7 = vsyncpa [#allocation4], 0
    %s8 = scalar_lea.sflag [#allocation4], 1
    %9 = vsyncpa %s8, 0
    %10 = vsyncpa [#allocation7], 0
    %s11 = scalar_lea.sflag [#allocation7], 1
    %12 = vsyncpa %s11, 0
    %13 = vsyncpa [#allocation5], 0
    loop: start=0, step=1, limit=4
    $region2: #{tpu_custom_call.1} parent=1 // loop_pre_header
      _
    $region3: #{tpu_custom_call.1} parent=1 // loop_header
      %s15 = sphi 0, %s19
      %p16 = scmp.ge.s32.totalorder %s15, 4
      %s22 = sphi 0, %s34
      %s23 = sphi 0, %s30
      %s24 = sphi 0, %s22
      %s25 = sphi 0, %s23
      %s26 = sphi 0, %s24
      %s27 = sphi 0, %s25
      %s39 = sphi 0, %s41
      %s42 = sphi 0, %s39
      %s43 = sphi 0, %s42
      %s59 = sphi 0, %s43
      %s67 = sphi 0, %s69
      %s70 = sphi 0, %s67
      %s71 = sphi 0, %s70
      %s87 = sphi 0, %s71
      %s91 = sphi 0, %s91
      %s93 = sphi 0, %s91
      %s94 = sphi 0, %s93
      %s108 = sphi 0, %s94
    $region4: #{tpu_custom_call.1} parent=1 // loop_header_branch
      %18 = sbr.rel (%p16) target = $region8
    $region5: #{tpu_custom_call.1} parent=1 // loop_body
      %s20 = ssub.s32 %s15, 1
      %s21 = ssub.s32 %s15, 2
      %s28 = sadd.s32 1, %s23
      %p29 = scmp.ge.s32.totalorder %s28, 1
      %s30 = scalar_select %p29, 0, %s28
      %s31 = sadd.s32 1, %s22
      %s32 = scalar_select %p29, %s31, %s22
      %p33 = scmp.ge.s32.totalorder %s32, 2
      %s34 = scalar_select %p33, 0, %s32
      %s35 = ssub.s32 %s22, %s34
      %s36 = ssub.s32 %s23, %s30
      %s37 = sor.u32 %s35, %s36
      %p38 = scmp.eq.s32.totalorder %s37, 0
      %s40 = sadd.s32 %s39, 1
      %s41 = scalar_select %p38, %s39, %s40
      %p44 = pneg %p38
      %p45 = scmp.eq.s32.totalorder %s15, 1
      %p46 = por %p44, %p45
      %p47 = scmp.ne.s32.totalorder %s39, %s42
      %p48 = scmp.eq.s32.totalorder %s15, 0
      %p49 = por %p47, %p48
      %p50 = scmp.ne.s32.totalorder %s39, %s42
      %p51 = scmp.eq.s32.totalorder %s20, 1
      %p52 = por %p50, %p51
      %p53 = scmp.ne.s32.totalorder %s42, %s43
      %p54 = scmp.eq.s32.totalorder %s20, 0
      %p55 = por %p53, %p54
      %p56 = scmp.ne.s32.totalorder %s42, %s43
      %p57 = scmp.eq.s32.totalorder %s21, 1
      %p58 = por %p56, %p57
      %p60 = scmp.ne.s32.totalorder %s43, %s59
      %p61 = scmp.eq.s32.totalorder %s21, 0
      %p62 = por %p60, %p61
      %s63 = ssub.s32 %s22, %s34
      %s64 = ssub.s32 %s23, %s30
      %s65 = sor.u32 %s63, %s64
      %p66 = scmp.eq.s32.totalorder %s65, 0
      %s68 = sadd.s32 %s67, 1
      %s69 = scalar_select %p66, %s67, %s68
      %p72 = pneg %p66
      %p73 = scmp.eq.s32.totalorder %s15, 1
      %p74 = por %p72, %p73
      %p75 = scmp.ne.s32.totalorder %s67, %s70
      %p76 = scmp.eq.s32.totalorder %s15, 0
      %p77 = por %p75, %p76
      %p78 = scmp.ne.s32.totalorder %s67, %s70
      %p79 = scmp.eq.s32.totalorder %s20, 1
      %p80 = por %p78, %p79
      %p81 = scmp.ne.s32.totalorder %s70, %s71
      %p82 = scmp.eq.s32.totalorder %s20, 0
      %p83 = por %p81, %p82
      %p84 = scmp.ne.s32.totalorder %s70, %s71
      %p85 = scmp.eq.s32.totalorder %s21, 1
      %p86 = por %p84, %p85
      %p88 = scmp.ne.s32.totalorder %s71, %s87
      %p89 = scmp.eq.s32.totalorder %s21, 0
      %p90 = por %p88, %p89
      %s92 = sadd.s32 %s91, 1
      %p95 = scmp.eq.s32.totalorder %s15, 1
      %p96 = scmp.ne.s32.totalorder %s91, %s93
      %p97 = scmp.eq.s32.totalorder %s15, 0
      %p98 = por %p96, %p97
      %p99 = scmp.ne.s32.totalorder %s91, %s93
      %p100 = scmp.eq.s32.totalorder %s20, 1
      %p101 = por %p99, %p100
      %p102 = scmp.ne.s32.totalorder %s93, %s94
      %p103 = scmp.eq.s32.totalorder %s20, 0
      %p104 = por %p102, %p103
      %p105 = scmp.ne.s32.totalorder %s93, %s94
      %p106 = scmp.eq.s32.totalorder %s21, 1
      %p107 = por %p105, %p106
      %p109 = scmp.ne.s32.totalorder %s94, %s108
      %p110 = scmp.eq.s32.totalorder %s21, 0
      %p111 = por %p109, %p110
      %p112 = scmp.le.s32.totalorder 1, %s15
      %p113 = scmp.lt.s32.totalorder %s15, 3
      %p114 = pnand %p112, %p113
      %p115 = pneg %p114
      // Predicated region
      $region9: #{tpu_custom_call.1} parent=5 // pred_check
        _
      $region10: #{tpu_custom_call.1} parent=5 // pred_check_branch
        %117 = sbr.rel (%p114) target = $region12
      $region11: #{tpu_custom_call.1} parent=5 // pred_region
        %s118 = ssub.s32 %s15, 1
      $region12: #{tpu_custom_call.1} parent=5 // pred_fallthru
        _
      %p119 = scmp.lt.s32.totalorder %s15, 2
      // Predicated region
      $region13: #{tpu_custom_call.1} parent=5 // pred_check
        %p120 = pneg %p119
      $region14: #{tpu_custom_call.1} parent=5 // pred_check_branch
        %122 = sbr.rel (%p120) target = $region16
      $region15: #{tpu_custom_call.1} parent=5 // pred_region
        // Predicated region
        $region17: #{tpu_custom_call.1} parent=15 // pred_check
          %p123 = pneg %p49
        $region18: #{tpu_custom_call.1} parent=15 // pred_check_branch
          %125 = sbr.rel (%p123) target = $region20
        $region19: #{tpu_custom_call.1} parent=15 // pred_region
          %s126 = sand.u32 %s39, 1
          %s127 = scalar_lea.sflag [#allocation4], %s126
          %s128 = sand.u32 %s39, 1
          %s129 = smul.addr %s128, 8
          %s130 = scalar_lea.vmem [#allocation3], %s129
          %s131 = smul.u32 2, %s23
          %s133 = ssub.s32 128, 128
          %134 = vsyncadd %s127, %s133
          %s135 = smul.addr %s22, 2
          %s136 = sadd.s32 %s131, %s135
          %s137 = smul.addr %s136, 64
          %s138 = scalar_lea.hbm %s0, %s137
          %s140 = sshll.u32 %s130, 4
          %s141 = int_to_ptr.vmem [resolvable:$true] %s140
          %143 = dma.hbm_to_vmem [thread:$0]  %s138, 128, %s141, %s127
        $region20: #{tpu_custom_call.1} parent=15 // pred_fallthru
          _
        // Predicated region
        $region21: #{tpu_custom_call.1} parent=15 // pred_check
          %p144 = pneg %p77
        $region22: #{tpu_custom_call.1} parent=15 // pred_check_branch
          %146 = sbr.rel (%p144) target = $region24
        $region23: #{tpu_custom_call.1} parent=15 // pred_region
          %s147 = sand.u32 %s67, 1
          %s148 = scalar_lea.sflag [#allocation7], %s147
          %s149 = sand.u32 %s67, 1
          %s150 = smul.addr %s149, 8
          %s151 = scalar_lea.vmem [#allocation6], %s150
          %s152 = smul.u32 2, %s23
          %s154 = ssub.s32 128, 128
          %155 = vsyncadd %s148, %s154
          %s156 = smul.addr %s22, 2
          %s157 = sadd.s32 %s152, %s156
          %s158 = smul.addr %s157, 64
          %s159 = scalar_lea.hbm %s1, %s158
          %s161 = sshll.u32 %s151, 4
          %s162 = int_to_ptr.vmem [resolvable:$true] %s161
          %164 = dma.hbm_to_vmem [thread:$0]  %s159, 128, %s162, %s148
        $region24: #{tpu_custom_call.1} parent=15 // pred_fallthru
          _
      $region16: #{tpu_custom_call.1} parent=5 // pred_fallthru
        _
      %p165 = scmp.le.s32.totalorder 1, %s15
      %p166 = scmp.lt.s32.totalorder %s15, 3
      %p167 = pnand %p165, %p166
      %p168 = pneg %p167
      // Predicated region
      $region25: #{tpu_custom_call.1} parent=5 // pred_check
        _
      $region26: #{tpu_custom_call.1} parent=5 // pred_check_branch
        %170 = sbr.rel (%p167) target = $region28
      $region27: #{tpu_custom_call.1} parent=5 // pred_region
        %s171 = ssub.s32 %s15, 1
        %s172 = sand.u32 %s42, 1
        %s173 = scalar_lea.sflag [#allocation4], %s172
        %s174 = sand.u32 %s42, 1
        %s175 = smul.addr %s174, 8
        %s176 = scalar_lea.vmem [#allocation3], %s175
        // Predicated region
        $region29: #{tpu_custom_call.1} parent=27 // pred_check
          %p177 = pneg %p55
        $region30: #{tpu_custom_call.1} parent=27 // pred_check_branch
          %179 = sbr.rel (%p177) target = $region32
        $region31: #{tpu_custom_call.1} parent=27 // pred_region
          %180 = dma.done %s173, 128
        $region32: #{tpu_custom_call.1} parent=27 // pred_fallthru
          _
        %s181 = sand.u32 %s70, 1
        %s182 = scalar_lea.sflag [#allocation7], %s181
        %s183 = sand.u32 %s70, 1
        %s184 = smul.addr %s183, 8
        %s185 = scalar_lea.vmem [#allocation6], %s184
        // Predicated region
        $region33: #{tpu_custom_call.1} parent=27 // pred_check
          %p186 = pneg %p83
        $region34: #{tpu_custom_call.1} parent=27 // pred_check_branch
          %188 = sbr.rel (%p186) target = $region36
        $region35: #{tpu_custom_call.1} parent=27 // pred_region
          %189 = dma.done %s182, 128
        $region36: #{tpu_custom_call.1} parent=27 // pred_fallthru
          _
        %s190 = sand.u32 %s42, 1
        %s191 = scalar_lea.sflag [#allocation4], %s190
        %s192 = sand.u32 %s42, 1
        %s193 = smul.addr %s192, 8
        %s194 = scalar_lea.vmem [#allocation3], %s193
        %p195 = pneg %p55
        %p196 = pneg %p52
        %s197 = sand.u32 %s70, 1
        %s198 = scalar_lea.sflag [#allocation7], %s197
        %s199 = sand.u32 %s70, 1
        %s200 = smul.addr %s199, 8
        %s201 = scalar_lea.vmem [#allocation6], %s200
        %p202 = pneg %p83
        %p203 = pneg %p80
        %p204 = pneg %p104
        %p205 = pneg %p101
        %s206 = smul.u32 2, %s25
        %s207 = smul.u32 2, %s25
        %p208 = scmp.eq.s32.totalorder %s24, 0
        %p209 = scmp.eq.s32.totalorder %s25, 0
        %p210 = pnand %p208, %p209
        %p211 = pneg %p210
        // Predicated region
        $region37: #{tpu_custom_call.1} parent=27 // pred_check
          _
        $region38: #{tpu_custom_call.1} parent=27 // pred_check_branch
          %213 = sbr.rel (%p210) target = $region40
        $region39: #{tpu_custom_call.1} parent=27 // pred_region
          %v214 = vlaneseq
          %vm215 = vcmp.ge.s32.totalorder %v214, 0
          %vm216 = vcmp.lt.s32.totalorder %v214, 256
          %vm217 = vmand %vm215, %vm216
          %218 = vst.msk [vmem:[#allocation2] sm:$0x3] %vm217, 0.0
        $region40: #{tpu_custom_call.1} parent=27 // pred_fallthru
          _
        %v219 = vld [vmem:[%s176] sm:$0xff]
        %v220 = vld [vmem:[%s185] sm:$0xff]
        %v221 = vmul.f32 %v219, %v220
        %v223 = vcombine.high %v221, %v221
        %vm225 = vcmask 1043456
        %v226 = vsel %vm225, %v221, 0.0
        %v227 = vrot.slane %v226, 4
        %v228 = vadd.f32 %v226, %v227
        %v229 = vrot.slane %v228, 2
        %v230 = vadd.f32 %v228, %v229
        %v231 = vrot.slane %v230, 1
        %v232 = vadd.f32 %v230, %v231
        %v233 = vsel %vm225, %v223, 0.0
        %v234 = vrot.slane %v233, 4
        %v235 = vadd.f32 %v233, %v234
        %v236 = vrot.slane %v235, 2
        %v237 = vadd.f32 %v235, %v236
        %v238 = vrot.slane %v237, 1
        %v239 = vadd.f32 %v237, %v238
        %v240 = vmul.f32 %v219, %v219
        %v242 = vcombine.high %v240, %v240
        %v244 = vsel %vm225, %v240, 0.0
        %v245 = vrot.slane %v244, 4
        %v246 = vadd.f32 %v244, %v245
        %v247 = vrot.slane %v246, 2
        %v248 = vadd.f32 %v246, %v247
        %v249 = vrot.slane %v248, 1
        %v250 = vadd.f32 %v248, %v249
        %v251 = vsel %vm225, %v242, 0.0
        %v252 = vrot.slane %v251, 4
        %v253 = vadd.f32 %v251, %v252
        %v254 = vrot.slane %v253, 2
        %v255 = vadd.f32 %v253, %v254
        %v256 = vrot.slane %v255, 1
        %v257 = vadd.f32 %v255, %v256
        %v258 = vmul.f32 %v220, %v220
        %v260 = vcombine.high %v258, %v258
        %v262 = vsel %vm225, %v258, 0.0
        %v263 = vrot.slane %v262, 4
        %v264 = vadd.f32 %v262, %v263
        %v265 = vrot.slane %v264, 2
        %v266 = vadd.f32 %v264, %v265
        %v267 = vrot.slane %v266, 1
        %v268 = vadd.f32 %v266, %v267
        %v269 = vsel %vm225, %v260, 0.0
        %v270 = vrot.slane %v269, 4
        %v271 = vadd.f32 %v269, %v270
        %v272 = vrot.slane %v271, 2
        %v273 = vadd.f32 %v271, %v272
        %v274 = vrot.slane %v273, 1
        %v275 = vadd.f32 %v273, %v274
        %v276 = vmul.f32 %v250, %v268
        %v277 = vmul.f32 %v257, %v275
        %v278 = vmax.f32 %v276, 1e-24
        %v279 = vmax.f32 %v277, 1e-24
        %v280 = vrsqrt.pop %v278
        %v281 = vrsqrt.pop %v279
        %v282 = vmul.f32 %v232, %v280
        %v283 = vmul.f32 %v239, %v281
        %v284 = vsub.f32 1.0, %v282
        %v285 = vsub.f32 1.0, %v283
        %v286 = vld [vmem:[#allocation2] sm:$0x3]
        %v289 = vcombine.low %v284, %v285
        %v291 = vunpack.c.l.s4 1966171168
        %v292 = vunpack.c.0.s8 %v291
        %v293 = vlaneseq
        %v294 = vshrl.u32 %v293, 7
        %v295 = vsub.s32 %v292, %v294
        %v296 = vrot.slane %v289, %v295
        %v298 = vunpack.c.l.s4 1966171168
        %v299 = vunpack.c.0.s8 %v298
        %v300 = vlaneseq
        %v301 = vshrl.u32 %v300, 7
        %v302 = vsub.s32 %v299, %v301
        %v303 = vrot.slane %v296, %v302
        %v305 = vadd.f32 %v286, %v303
        %v306 = vlaneseq
        %vm307 = vcmp.ge.s32.totalorder %v306, 0
        %vm308 = vcmp.lt.s32.totalorder %v306, 256
        %vm309 = vmand %vm307, %vm308
        %310 = vst.msk [vmem:[#allocation2] sm:$0x3] %vm309, %v305
        %p311 = scmp.eq.s32.totalorder %s24, 1
        %p312 = pnand %p311, %p209
        %p313 = pneg %p312
        // Predicated region
        $region41: #{tpu_custom_call.1} parent=27 // pred_check
          _
        $region42: #{tpu_custom_call.1} parent=27 // pred_check_branch
          %315 = sbr.rel (%p312) target = $region44
        $region43: #{tpu_custom_call.1} parent=27 // pred_region
          %v316 = vld [vmem:[#allocation2] sm:$0x3]
          %v318 = vlaneseq
          %v319 = vshrl.u32 %v318, 7
          %v320 = vsub.s32 0, %v319
          %v321 = vrot.slane %v316, %v320
          %v322 = vlaneseq
          %v323 = vshrl.u32 %v322, 7
          %v324 = vsub.s32 1, %v323
          %v325 = vrot.slane %v316, %v324
          %vm328 = vcmask 1040384
          %v329 = vsel %vm328, %v321, 0.0
          %v330 = vsel %vm328, %v325, 0.0
          %v331 = vadd.f32 %v329, %v330
          %332 = vadd.xlane.f32.xlu0 %v331
          %v333 = vpop.xlane.xlu0 %332
          %v334 = vrot.slane %v333, 4
          %v335 = vadd.f32 %v333, %v334
          %v336 = vrot.slane %v335, 2
          %v337 = vadd.f32 %v335, %v336
          %v338 = vrot.slane %v337, 1
          %v339 = vadd.f32 %v337, %v338
          %s340 = vtos %v339
          %v341 = vstv %s340
          %v342 = vrcp.pop 512.0
          %v343 = vmul.f32 %v341, %v342
          %vm344 = vcmask 0
          %345 = vst.msk [vmem:[#allocation8] sm:$0x1] %vm344, %v343
        $region44: #{tpu_custom_call.1} parent=27 // pred_fallthru
          _
        // Predicated region
        $region45: #{tpu_custom_call.1} parent=27 // pred_check
          %p346 = pneg %p101
        $region46: #{tpu_custom_call.1} parent=27 // pred_check_branch
          %348 = sbr.rel (%p346) target = $region48
        $region47: #{tpu_custom_call.1} parent=27 // pred_region
          %s350 = ssub.s32 16, 16
          %351 = vsyncadd [#allocation5], %s350
          %s353 = sshll.u32 [#allocation8], 4
          %s354 = int_to_ptr.vmem [resolvable:$true] %s353
          %356 = dma.vmem_to_hbm [thread:$0]  %s354, 16, %s2, [#allocation5]
        $region48: #{tpu_custom_call.1} parent=27 // pred_fallthru
          _
        // Predicated region
        $region49: #{tpu_custom_call.1} parent=27 // pred_check
          %p357 = pneg %p101
        $region50: #{tpu_custom_call.1} parent=27 // pred_check_branch
          %359 = sbr.rel (%p357) target = $region52
        $region51: #{tpu_custom_call.1} parent=27 // pred_region
          %360 = dma.done [#allocation5], 16
        $region52: #{tpu_custom_call.1} parent=27 // pred_fallthru
          _
      $region28: #{tpu_custom_call.1} parent=5 // pred_fallthru
        _
      %p361 = scmp.le.s32.totalorder 2, %s15
      // Predicated region
      $region53: #{tpu_custom_call.1} parent=5 // pred_check
        %p362 = pneg %p361
      $region54: #{tpu_custom_call.1} parent=5 // pred_check_branch
        %364 = sbr.rel (%p362) target = $region56
      $region55: #{tpu_custom_call.1} parent=5 // pred_region
        %s365 = ssub.s32 %s15, 2
      $region56: #{tpu_custom_call.1} parent=5 // pred_fallthru
        _
    $region6: #{tpu_custom_call.1} parent=1 // loop_footer
      %s19 = sadd.s32 1, %s15
    $region7: #{tpu_custom_call.1} parent=1 // loop_footer_branch
      %14 = sbr.rel target = $region3
    $region8: #{tpu_custom_call.1} parent=1 // loop_exit
      _
    %366 = vsyncpa [#allocation4], 1
    %s367 = scalar_lea.sflag [#allocation4], 1
    %368 = vsyncpa %s367, 1
    %369 = vsyncpa [#allocation7], 1
    %s370 = scalar_lea.sflag [#allocation7], 1
    %371 = vsyncpa %s370, 1
    %372 = vsyncpa [#allocation5], 1
    %s373 = scalar_lea.sflag [#allocation5], 1
    %374 = vsyncpa %s373, 1

</llo_original>
